<compile_context>
chip_gen: v7x
topology: tpu7x:2x2x1
jax: 0.10.0
libtpu: 0.0.40
codegen_flags: <defaults>
</compile_context>

<pallas_src>
import jax
import jax.numpy as jnp
from jax.experimental import pallas as pl
from jax.experimental.pallas import tpu as pltpu


def _round_up(n, m):
    return ((n + m - 1) // m) * m


# ---------------------------------------------------------------------------
# Kernel
# ---------------------------------------------------------------------------
def _sac_critic_kernel(s_ref, a_ref,
                       w1s_ref, w1a_ref, b1_ref,
                       w2_ref, b2_ref,
                       w3_ref, b3_ref,
                       out_ref):
    # Layer 1:  x @ W1  ==  states @ W1[:S]  +  actions @ W1[S:]
    h = (jnp.dot(s_ref[...], w1s_ref[...], preferred_element_type=jnp.float32)
         + jnp.dot(a_ref[...], w1a_ref[...], preferred_element_type=jnp.float32)
         + b1_ref[...])
    h = jnp.maximum(h, 0.0).astype(w2_ref.dtype)          # ReLU (f32) -> bf16

    # Layer 2 (block-diagonal fused 512x512)
    h = jnp.dot(h, w2_ref[...], preferred_element_type=jnp.float32) + b2_ref[...]
    h = jnp.maximum(h, 0.0).astype(w3_ref.dtype)          # ReLU (f32) -> bf16

    # Layer 3: fused (512, 2) projection -> [q1, q2]
    out_ref[...] = (jnp.dot(h, w3_ref[...], preferred_element_type=jnp.float32)
                    + b3_ref[...])


# ---------------------------------------------------------------------------
# Trace-time fusion of the two critic heads
# ---------------------------------------------------------------------------
def _fuse_params(params1, params2, n_states, compute_dtype):
    w1a_, b1a_, w2a_, b2a_, w3a_, b3a_ = params1
    w1b_, b1b_, w2b_, b2b_, w3b_, b3b_ = params2
    H = w1a_.shape[1]                                      # 256

    W1 = jnp.concatenate([w1a_, w1b_], axis=1)             # (D, 2H)
    w1_s = W1[:n_states].astype(compute_dtype)             # (S, 2H)
    w1_a = W1[n_states:].astype(compute_dtype)             # (A, 2H)
    b1 = jnp.concatenate([b1a_, b1b_], axis=1).astype(jnp.float32)

    z = jnp.zeros((H, H), w2a_.dtype)
    W2 = jnp.block([[w2a_, z], [z, w2b_]]).astype(compute_dtype)   # (2H, 2H)
    b2 = jnp.concatenate([b2a_, b2b_], axis=1).astype(jnp.float32)

    W3 = jnp.concatenate(
        [jnp.concatenate([w3a_, jnp.zeros_like(w3a_)], axis=1),
         jnp.concatenate([jnp.zeros_like(w3b_), w3b_], axis=1)],
        axis=0).astype(compute_dtype)                      # (2H, 2)
    b3 = jnp.concatenate([b3a_, b3b_], axis=1).astype(jnp.float32)  # (1, 2)

    return w1_s, w1_a, b1, W2, b2, W3, b3


# ---------------------------------------------------------------------------
# Wrapper
# ---------------------------------------------------------------------------
def sac_critic_forward(states, actions, params1, params2, *,
                       compute_dtype=jnp.bfloat16, max_tile_b=1024):
    """states: (B, S), actions: (B, A). Returns (q1, q2), each (B, 1)."""
    B, S = states.shape
    A = actions.shape[1]

    fused = _fuse_params(params1, params2, S, compute_dtype)
    w1_s, w1_a, b1, W2, b2, W3, b3 = fused
    H2 = W2.shape[0]                                       # 512 (both heads)

    # Batch tiling: tile fits easily in VMEM even on v7x (64 MiB):
    # resident fused weights ~0.6 MiB bf16 + (tile_b, 512) f32 hidden temporaries.
    tile_b = min(max_tile_b, _round_up(B, 8))
    Bp = _round_up(B, tile_b)
    if Bp != B:
        states = jnp.pad(states, ((0, Bp - B), (0, 0)))
        actions = jnp.pad(actions, ((0, Bp - B), (0, 0)))
    s = states.astype(compute_dtype)
    a = actions.astype(compute_dtype)

    grid = (Bp // tile_b,)

    def const_spec(arr):
        # Full-array block, constant index -> stays VMEM-resident across steps.
        return pl.BlockSpec(arr.shape, lambda i: (0,) * arr.ndim)

    in_specs = [
        pl.BlockSpec((tile_b, S), lambda i: (i, 0)),       # states tile (pipelined)
        pl.BlockSpec((tile_b, A), lambda i: (i, 0)),       # actions tile (pipelined)
        const_spec(w1_s), const_spec(w1_a), const_spec(b1),
        const_spec(W2), const_spec(b2),
        const_spec(W3), const_spec(b3),
    ]
    out_spec = pl.BlockSpec((tile_b, 2), lambda i: (i, 0))

    nbytes = lambda x: int(x.size) * x.dtype.itemsize
    flops = 2 * Bp * (S * H2 + A * H2 + H2 * H2 + H2 * 2)
    bytes_accessed = (nbytes(s) + nbytes(a)
                      + sum(nbytes(w) for w in fused)
                      + Bp * 2 * 4)
    cost = pl.CostEstimate(flops=flops, transcendentals=0,
                           bytes_accessed=bytes_accessed)

    out = pl.pallas_call(
        _sac_critic_kernel,
        out_shape=jax.ShapeDtypeStruct((Bp, 2), jnp.float32),
        grid=grid,
        in_specs=in_specs,
        out_specs=out_spec,
        compiler_params=pltpu.CompilerParams(
            dimension_semantics=("parallel",)),            # megacore on v7x
        cost_estimate=cost,
    )(s, a, *fused)

    q = out[:B]
    return q[:, 0:1], q[:, 1:2]


# ---------------------------------------------------------------------------
# Parameter init (PyTorch-like uniform fan-in), weights stored (in, out)
# ---------------------------------------------------------------------------
def init_mlp_params(key, d_in, d_hidden=256, d_out=1):
    ks = jax.random.split(key, 6)

    def lin(kw, kb, fan_in, fan_out):
        bound = 1.0 / jnp.sqrt(jnp.float32(fan_in))
        w = jax.random.uniform(kw, (fan_in, fan_out), jnp.float32, -bound, bound)
        b = jax.random.uniform(kb, (1, fan_out), jnp.float32, -bound, bound)
        return w, b

    w1, b1 = lin(ks[0], ks[1], d_in, d_hidden)
    w2, b2 = lin(ks[2], ks[3], d_hidden, d_hidden)
    w3, b3 = lin(ks[4], ks[5], d_hidden, d_out)
    return (w1, b1, w2, b2, w3, b3)


if __name__ == "__main__":
    # Small shapes consistent with the module: state_shape=(16,), action_shape=4
    B, S, A = 2, 16, 4
    key = jax.random.PRNGKey(0)
    k_s, k_a, k_p1, k_p2 = jax.random.split(key, 4)

    states = jax.random.normal(k_s, (B, S), dtype=jnp.float32)
    actions = jax.random.normal(k_a, (B, A), dtype=jnp.float32)

    params1 = init_mlp_params(k_p1, S + A)
    params2 = init_mlp_params(k_p2, S + A)

    q1, q2 = sac_critic_forward(states, actions, params1, params2)
    q1, q2 = jax.block_until_ready(q1), jax.block_until_ready(q2)

    # Pure-JAX f32 reference (two independent heads, like the PyTorch module)
    def ref_mlp(x, p):
        w1, b1, w2, b2, w3, b3 = p
        h = jnp.maximum(x @ w1 + b1, 0.0)
        h = jnp.maximum(h @ w2 + b2, 0.0)
        return h @ w3 + b3

    x = jnp.concatenate([states, actions], axis=-1)
    r1, r2 = ref_mlp(x, params1), ref_mlp(x, params2)
    assert q1.shape == (B, 1) and q2.shape == (B, 1)
    # bf16 matmul inputs with f32 accumulation vs f32 reference -> loose tol.
    assert jnp.allclose(q1, r1, atol=2e-2, rtol=2e-2)
    assert jnp.allclose(q2, r2, atol=2e-2, rtol=2e-2)

    print("KERNEL_OK")
</pallas_src>

<mosaic_0001>
module attributes {stable_mosaic.version = 11 : i64} {
  func.func @_sac_critic_kernel(%arg0: i32, %arg1: memref<8x16xbf16, #tpu.memory_space<vmem>>, %arg2: memref<8x4xbf16, #tpu.memory_space<vmem>>, %arg3: memref<16x512xbf16, #tpu.memory_space<vmem>>, %arg4: memref<4x512xbf16, #tpu.memory_space<vmem>>, %arg5: memref<1x512xf32, #tpu.memory_space<vmem>>, %arg6: memref<512x512xbf16, #tpu.memory_space<vmem>>, %arg7: memref<1x512xf32, #tpu.memory_space<vmem>>, %arg8: memref<512x2xbf16, #tpu.memory_space<vmem>>, %arg9: memref<1x2xf32, #tpu.memory_space<vmem>>, %arg10: memref<8x2xf32, #tpu.memory_space<vmem>>) attributes {dimension_semantics = [#tpu.dimension_semantics<parallel>], iteration_bounds = array<i64: 1>, scalar_prefetch = 0 : i64, scratch_operands = 0 : i64, tpu.core_type = #tpu.core_type<tc>, window_params = [{transform_indices = @transform_0, window_bounds = array<i64: 8, 16>}, {transform_indices = @transform_1, window_bounds = array<i64: 8, 4>}, {pipeline_mode = #tpu.pipeline_mode<synchronous>, transform_indices = @transform_2, window_bounds = array<i64: 16, 512>}, {pipeline_mode = #tpu.pipeline_mode<synchronous>, transform_indices = @transform_3, window_bounds = array<i64: 4, 512>}, {pipeline_mode = #tpu.pipeline_mode<synchronous>, transform_indices = @transform_4, window_bounds = array<i64: 1, 512>}, {pipeline_mode = #tpu.pipeline_mode<synchronous>, transform_indices = @transform_5, window_bounds = array<i64: 512, 512>}, {pipeline_mode = #tpu.pipeline_mode<synchronous>, transform_indices = @transform_6, window_bounds = array<i64: 1, 512>}, {pipeline_mode = #tpu.pipeline_mode<synchronous>, transform_indices = @transform_7, window_bounds = array<i64: 512, 2>}, {pipeline_mode = #tpu.pipeline_mode<synchronous>, transform_indices = @transform_8, window_bounds = array<i64: 1, 2>}, {transform_indices = @transform_9, window_bounds = array<i64: 8, 2>}]} {
    %c0 = arith.constant 0 : index
    %c0_0 = arith.constant 0 : index
    %0 = vector.load %arg1[%c0, %c0_0] : memref<8x16xbf16, #tpu.memory_space<vmem>>, vector<8x16xbf16>
    %c0_1 = arith.constant 0 : index
    %c0_2 = arith.constant 0 : index
    %1 = vector.load %arg3[%c0_1, %c0_2] : memref<16x512xbf16, #tpu.memory_space<vmem>>, vector<16x512xbf16>
    %cst = arith.constant dense<0.000000e+00> : vector<8x512xf32>
    %2 = tpu.matmul %0, %1, %cst {dimension_numbers = #tpu.dot_dimension_numbers<[1], [0], [0], [1], [0, 0, 1, 1], [], []>} : vector<8x16xbf16>, vector<16x512xbf16>, vector<8x512xf32> -> vector<8x512xf32>
    %c0_3 = arith.constant 0 : index
    %c0_4 = arith.constant 0 : index
    %3 = vector.load %arg2[%c0_3, %c0_4] : memref<8x4xbf16, #tpu.memory_space<vmem>>, vector<8x4xbf16>
    %c0_5 = arith.constant 0 : index
    %c0_6 = arith.constant 0 : index
    %4 = vector.load %arg4[%c0_5, %c0_6] : memref<4x512xbf16, #tpu.memory_space<vmem>>, vector<4x512xbf16>
    %cst_7 = arith.constant dense<0.000000e+00> : vector<8x512xf32>
    %5 = tpu.matmul %3, %4, %cst_7 {dimension_numbers = #tpu.dot_dimension_numbers<[1], [0], [0], [1], [0, 0, 1, 1], [], []>} : vector<8x4xbf16>, vector<4x512xbf16>, vector<8x512xf32> -> vector<8x512xf32>
    %6 = arith.addf %2, %5 : vector<8x512xf32>
    %c0_8 = arith.constant 0 : index
    %c0_9 = arith.constant 0 : index
    %7 = vector.load %arg5[%c0_8, %c0_9] : memref<1x512xf32, #tpu.memory_space<vmem>>, vector<1x512xf32>
    %8 = vector.broadcast %7 : vector<1x512xf32> to vector<8x512xf32>
    %9 = arith.addf %6, %8 : vector<8x512xf32>
    %cst_10 = arith.constant 0.000000e+00 : f32
    %10 = vector.broadcast %cst_10 : f32 to vector<8x512xf32>
    %11 = arith.maximumf %9, %10 : vector<8x512xf32>
    %12 = arith.truncf %11 : vector<8x512xf32> to vector<8x512xbf16>
    %c0_11 = arith.constant 0 : index
    %c0_12 = arith.constant 0 : index
    %13 = vector.load %arg6[%c0_11, %c0_12] : memref<512x512xbf16, #tpu.memory_space<vmem>>, vector<512x512xbf16>
    %cst_13 = arith.constant dense<0.000000e+00> : vector<8x512xf32>
    %14 = tpu.matmul %12, %13, %cst_13 {dimension_numbers = #tpu.dot_dimension_numbers<[1], [0], [0], [1], [0, 0, 1, 1], [], []>} : vector<8x512xbf16>, vector<512x512xbf16>, vector<8x512xf32> -> vector<8x512xf32>
    %c0_14 = arith.constant 0 : index
    %c0_15 = arith.constant 0 : index
    %15 = vector.load %arg7[%c0_14, %c0_15] : memref<1x512xf32, #tpu.memory_space<vmem>>, vector<1x512xf32>
    %16 = vector.broadcast %15 : vector<1x512xf32> to vector<8x512xf32>
    %17 = arith.addf %14, %16 : vector<8x512xf32>
    %cst_16 = arith.constant 0.000000e+00 : f32
    %18 = vector.broadcast %cst_16 : f32 to vector<8x512xf32>
    %19 = arith.maximumf %17, %18 : vector<8x512xf32>
    %20 = arith.truncf %19 : vector<8x512xf32> to vector<8x512xbf16>
    %c0_17 = arith.constant 0 : index
    %c0_18 = arith.constant 0 : index
    %21 = vector.load %arg8[%c0_17, %c0_18] : memref<512x2xbf16, #tpu.memory_space<vmem>>, vector<512x2xbf16>
    %cst_19 = arith.constant dense<0.000000e+00> : vector<8x2xf32>
    %22 = tpu.matmul %20, %21, %cst_19 {dimension_numbers = #tpu.dot_dimension_numbers<[1], [0], [0], [1], [0, 0, 1, 1], [], []>} : vector<8x512xbf16>, vector<512x2xbf16>, vector<8x2xf32> -> vector<8x2xf32>
    %c0_20 = arith.constant 0 : index
    %c0_21 = arith.constant 0 : index
    %23 = vector.load %arg9[%c0_20, %c0_21] : memref<1x2xf32, #tpu.memory_space<vmem>>, vector<1x2xf32>
    %24 = vector.broadcast %23 : vector<1x2xf32> to vector<8x2xf32>
    %25 = arith.addf %22, %24 : vector<8x2xf32>
    %c0_22 = arith.constant 0 : index
    %c0_23 = arith.constant 0 : index
    %26 = vector.load %arg10[%c0_22, %c0_23] : memref<8x2xf32, #tpu.memory_space<vmem>>, vector<8x2xf32>
    tpu.vector_store %arg10[%c0_22, %c0_23], %25 {strides = array<i32>} : memref<8x2xf32, #tpu.memory_space<vmem>>, vector<8x2xf32>,
    return
  }
  func.func @transform_0(%arg0: i32) -> (i32, i32) {
    %c0_i32 = arith.constant 0 : i32
    %c0_i32_0 = arith.constant 0 : i32
    return %arg0, %c0_i32 : i32, i32
  }
  func.func @transform_1(%arg0: i32) -> (i32, i32) {
    %c0_i32 = arith.constant 0 : i32
    %c0_i32_0 = arith.constant 0 : i32
    return %arg0, %c0_i32 : i32, i32
  }
  func.func @transform_2(%arg0: i32) -> (i32, i32) {
    %c0_i32 = arith.constant 0 : i32
    %c0_i32_0 = arith.constant 0 : i32
    %c0_i32_1 = arith.constant 0 : i32
    return %c0_i32, %c0_i32_0 : i32, i32
  }
  func.func @transform_3(%arg0: i32) -> (i32, i32) {
    %c0_i32 = arith.constant 0 : i32
    %c0_i32_0 = arith.constant 0 : i32
    %c0_i32_1 = arith.constant 0 : i32
    return %c0_i32, %c0_i32_0 : i32, i32
  }
  func.func @transform_4(%arg0: i32) -> (i32, i32) {
    %c0_i32 = arith.constant 0 : i32
    %c0_i32_0 = arith.constant 0 : i32
    %c0_i32_1 = arith.constant 0 : i32
    return %c0_i32, %c0_i32_0 : i32, i32
  }
  func.func @transform_5(%arg0: i32) -> (i32, i32) {
    %c0_i32 = arith.constant 0 : i32
    %c0_i32_0 = arith.constant 0 : i32
    %c0_i32_1 = arith.constant 0 : i32
    return %c0_i32, %c0_i32_0 : i32, i32
  }
  func.func @transform_6(%arg0: i32) -> (i32, i32) {
    %c0_i32 = arith.constant 0 : i32
    %c0_i32_0 = arith.constant 0 : i32
    %c0_i32_1 = arith.constant 0 : i32
    return %c0_i32, %c0_i32_0 : i32, i32
  }
  func.func @transform_7(%arg0: i32) -> (i32, i32) {
    %c0_i32 = arith.constant 0 : i32
    %c0_i32_0 = arith.constant 0 : i32
    %c0_i32_1 = arith.constant 0 : i32
    return %c0_i32, %c0_i32_0 : i32, i32
  }
  func.func @transform_8(%arg0: i32) -> (i32, i32) {
    %c0_i32 = arith.constant 0 : i32
    %c0_i32_0 = arith.constant 0 : i32
    %c0_i32_1 = arith.constant 0 : i32
    return %c0_i32, %c0_i32_0 : i32, i32
  }
  func.func @transform_9(%arg0: i32) -> (i32, i32) {
    %c0_i32 = arith.constant 0 : i32
    %c0_i32_0 = arith.constant 0 : i32
    return %arg0, %c0_i32 : i32, i32
  }
}

</mosaic_0001>

<llo_original>
// kernel: tpu_custom_call.1
$region0: #{tpu_custom_call.1}
  #allocation0 [shape = 'u32[]', space=smem, size = 0x4, offset = 0x4, fixed_abs, tag = 'smem constant byte address 0x4 - core index']
  #allocation1 [shape = 'u32[144,128]{1,0:T(1,128)}', space=vmem, size = 0x12000, scoped, tag = 'internal scratch']
  %s0 = inlined_call_operand.vmem [shape: bf16[8,16], index: 0, kind: input, shape index: {}]
  %s1 = inlined_call_operand.vmem [shape: bf16[8,4], index: 1, kind: input, shape index: {}]
  %s2 = inlined_call_operand.vmem [shape: bf16[16,512], index: 2, kind: input, shape index: {}]
  %s3 = inlined_call_operand.vmem [shape: bf16[4,512], index: 3, kind: input, shape index: {}]
  %s4 = inlined_call_operand.vmem [shape: f32[1,512], index: 4, kind: input, shape index: {}]
  %s5 = inlined_call_operand.hbm [shape: bf16[512,512], index: 5, kind: input, shape index: {}]
  %s6 = inlined_call_operand.vmem [shape: f32[1,512], index: 6, kind: input, shape index: {}]
  %s7 = inlined_call_operand.vmem [shape: bf16[512,2], index: 7, kind: input, shape index: {}]
  %s8 = inlined_call_operand.vmem [shape: f32[1,2], index: 8, kind: input, shape index: {}]
  %s9 = inlined_call_operand.vmem [shape: f32[8,2], index: 9, kind: output, shape index: {}]
  %s10 = sld [smem:[#allocation0]]
  $region50: #{tpu_custom_call.1} parent=0
    _
  %s12 = ssub.s32 1, %s10
  %s13 = scalar_select 0, %s12, %s10
  $region1: #{tpu_custom_call.1} parent=0
    #allocation2 [shape = 'u8[524288]{0}', space=vmem, size = 0x80000, scoped, tag = 'input window, operand 5, single buffered']
    #allocation3 [shape = 's32[1]{0}', space=sflag, size = 0x4, scoped, tag = 'scoped memory for tpu_custom_call.1']
    %14 = vsyncpa [#allocation3], 0
    // Predicated region
    $region2: #{tpu_custom_call.1} parent=1 // pred_check
      _
    $region3: #{tpu_custom_call.1} parent=1 // pred_check_branch
      %16 = sbr.rel (0) target = $region5
    $region4: #{tpu_custom_call.1} parent=1 // pred_region
      _
    $region5: #{tpu_custom_call.1} parent=1 // pred_fallthru
      _
    // Predicated region
    $region6: #{tpu_custom_call.1} parent=1 // pred_check
      _
    $region7: #{tpu_custom_call.1} parent=1 // pred_check_branch
      %18 = sbr.rel (0) target = $region9
    $region8: #{tpu_custom_call.1} parent=1 // pred_region
      _
    $region9: #{tpu_custom_call.1} parent=1 // pred_fallthru
      _
    // Predicated region
    $region10: #{tpu_custom_call.1} parent=1 // pred_check
      _
    $region11: #{tpu_custom_call.1} parent=1 // pred_check_branch
      %20 = sbr.rel (0) target = $region13
    $region12: #{tpu_custom_call.1} parent=1 // pred_region
      _
    $region13: #{tpu_custom_call.1} parent=1 // pred_fallthru
      _
    // Predicated region
    $region14: #{tpu_custom_call.1} parent=1 // pred_check
      _
    $region15: #{tpu_custom_call.1} parent=1 // pred_check_branch
      %22 = sbr.rel (0) target = $region17
    $region16: #{tpu_custom_call.1} parent=1 // pred_region
      _
    $region17: #{tpu_custom_call.1} parent=1 // pred_fallthru
      _
    // Predicated region
    $region18: #{tpu_custom_call.1} parent=1 // pred_check
      _
    $region19: #{tpu_custom_call.1} parent=1 // pred_check_branch
      %24 = sbr.rel (0) target = $region21
    $region20: #{tpu_custom_call.1} parent=1 // pred_region
      _
    $region21: #{tpu_custom_call.1} parent=1 // pred_fallthru
      _
    // Predicated region
    $region22: #{tpu_custom_call.1} parent=1 // pred_check
      _
    $region23: #{tpu_custom_call.1} parent=1 // pred_check_branch
      %26 = sbr.rel (0) target = $region25
    $region24: #{tpu_custom_call.1} parent=1 // pred_region
      %s28 = ssub.s32 16384, 16384
      %29 = vsyncadd [#allocation3], %s28
      %s30 = sshll.u32 [#allocation2], 4
      %s31 = int_to_ptr.vmem [resolvable:$true] %s30
      %36 = dma.hbm_to_vmem [thread:$0]  %s5, 16384, %s31, [#allocation3], 256, 256, 16
    $region25: #{tpu_custom_call.1} parent=1 // pred_fallthru
      _
    // Predicated region
    $region26: #{tpu_custom_call.1} parent=1 // pred_check
      _
    $region27: #{tpu_custom_call.1} parent=1 // pred_check_branch
      %38 = sbr.rel (0) target = $region29
    $region28: #{tpu_custom_call.1} parent=1 // pred_region
      _
    $region29: #{tpu_custom_call.1} parent=1 // pred_fallthru
      _
    // Predicated region
    $region30: #{tpu_custom_call.1} parent=1 // pred_check
      _
    $region31: #{tpu_custom_call.1} parent=1 // pred_check_branch
      %40 = sbr.rel (0) target = $region33
    $region32: #{tpu_custom_call.1} parent=1 // pred_region
      _
    $region33: #{tpu_custom_call.1} parent=1 // pred_fallthru
      _
    // Predicated region
    $region34: #{tpu_custom_call.1} parent=1 // pred_check
      _
    $region35: #{tpu_custom_call.1} parent=1 // pred_check_branch
      %42 = sbr.rel (0) target = $region37
    $region36: #{tpu_custom_call.1} parent=1 // pred_region
      _
    $region37: #{tpu_custom_call.1} parent=1 // pred_fallthru
      _
    // Predicated region
    $region38: #{tpu_custom_call.1} parent=1 // pred_check
      _
    $region39: #{tpu_custom_call.1} parent=1 // pred_check_branch
      %44 = sbr.rel (0) target = $region41
    $region40: #{tpu_custom_call.1} parent=1 // pred_region
      %45 = dma.done [#allocation3], 16384
    $region41: #{tpu_custom_call.1} parent=1 // pred_fallthru
      _
    %v47 = vld [vmem:[%s0] sm:$0xf]
    %v48 = vld [vmem:[%s2] sm:$0xff]
    %v49 = vld [vmem:[%s2 + $0x8] sm:$0xff]
    %v50 = vld [vmem:[%s2 + $0x10] sm:$0xff]
    %v51 = vld [vmem:[%s2 + $0x18] sm:$0xff]
    %v52 = vld [vmem:[%s1] sm:$0xf]
    %v53 = vld [vmem:[%s3] sm:$0xff]
    %v55 = vcombine.high %v53, %v53
    %v57 = vunpack.c.l.s4 1983009808
    %v58 = vunpack.c.0.s8 %v57
    %v59 = vlaneseq
    %v60 = vshrl.u32 %v59, 7
    %v61 = vsub.s32 %v58, %v60
    %v62 = vrot.slane %v53, %v61
    %v64 = vunpack.c.l.s4 1983009808
    %v65 = vunpack.c.0.s8 %v64
    %v66 = vlaneseq
    %v67 = vshrl.u32 %v66, 7
    %v68 = vsub.s32 %v65, %v67
    %v69 = vrot.slane %v55, %v68
    %v70 = vcombine.high %v62, %v62
    %v71 = vcombine.high %v69, %v69
    %vm72 = vcmask 31744
    %v74 = vsel %vm72, %v52, 0
    %vm76 = vcmask 1041408
    %v78 = vsel %vm76, %v62, 0
    %v81 = vsel %vm76, %v70, 0
    %v84 = vsel %vm76, %v69, 0
    %v87 = vsel %vm76, %v71, 0
    %89 = vmatprep.subr.bf16.mxu0 %v81
    %90 = vmatpush1.bf16.msra.mxu0 %v78
    %91 = vmatprep.subr.bf16.mxu0 0
    %92 = vmatpush1.bf16.msra.mxu0 0
    %93 = vmatprep.subr.bf16.mxu0 0
    %94 = vmatpush1.bf16.msra.mxu0 0
    %95 = vmatprep.subr.bf16.mxu0 0
    %96 = vmatpush1.bf16.msra.mxu0 0
    %97 = vmatprep.subr.bf16.mxu0 0
    %98 = vmatpush1.bf16.msra.mxu0 0
    %99 = vmatprep.subr.bf16.mxu0 0
    %100 = vmatpush1.bf16.msra.mxu0 0
    %101 = vmatprep.subr.bf16.mxu0 0
    %102 = vmatpush1.bf16.msra.mxu0 0
    %103 = vmatprep.subr.bf16.mxu0 0
    %104 = vmatpush1.bf16.msra.mxu0 0
    %105 = vmatprep.subr.bf16.mxu0 0
    %106 = vmatpush1.bf16.msra.mxu0 0
    %107 = vmatprep.subr.bf16.mxu0 0
    %108 = vmatpush1.bf16.msra.mxu0 0
    %109 = vmatprep.subr.bf16.mxu0 0
    %110 = vmatpush1.bf16.msra.mxu0 0
    %111 = vmatprep.subr.bf16.mxu0 0
    %112 = vmatpush1.bf16.msra.mxu0 0
    %113 = vmatprep.subr.bf16.mxu0 0
    %114 = vmatpush1.bf16.msra.mxu0 0
    %115 = vmatprep.subr.bf16.mxu0 0
    %116 = vmatpush1.bf16.msra.mxu0 0
    %117 = vmatprep.subr.bf16.mxu0 0
    %118 = vmatpush1.bf16.msra.mxu0 0
    %119 = vmatprep.subr.bf16.mxu0 0
    %120 = vmatpush1.bf16.msra.mxu0 0
    %121 = vmatprep.mubr.bf16.mxu0 0
    %122 = vmatmul.mubr.bf16.gmra.mrb[0].mxu0 %v74
    %v123 = vpop.f32.mrb[0].mxu0
    %v124 = vadd.f32 0.0, %v123
    %v125 = vpop.f32.mrb[0].mxu0
    %v126 = vadd.f32 0.0, %v125
    %v127 = vpop.f32.mrb[0].mxu0
    %v128 = vpop.f32.mrb[0].mxu0
    %129 = vdwg.mxu0
    %130 = vmatprep.subr.bf16.mxu0 %v87
    %131 = vmatpush1.bf16.msra.mxu0 %v84
    %132 = vmatprep.subr.bf16.mxu0 0
    %133 = vmatpush1.bf16.msra.mxu0 0
    %134 = vmatprep.subr.bf16.mxu0 0
    %135 = vmatpush1.bf16.msra.mxu0 0
    %136 = vmatprep.subr.bf16.mxu0 0
    %137 = vmatpush1.bf16.msra.mxu0 0
    %138 = vmatprep.subr.bf16.mxu0 0
    %139 = vmatpush1.bf16.msra.mxu0 0
    %140 = vmatprep.subr.bf16.mxu0 0
    %141 = vmatpush1.bf16.msra.mxu0 0
    %142 = vmatprep.subr.bf16.mxu0 0
    %143 = vmatpush1.bf16.msra.mxu0 0
    %144 = vmatprep.subr.bf16.mxu0 0
    %145 = vmatpush1.bf16.msra.mxu0 0
    %146 = vmatprep.subr.bf16.mxu0 0
    %147 = vmatpush1.bf16.msra.mxu0 0
    %148 = vmatprep.subr.bf16.mxu0 0
    %149 = vmatpush1.bf16.msra.mxu0 0
    %150 = vmatprep.subr.bf16.mxu0 0
    %151 = vmatpush1.bf16.msra.mxu0 0
    %152 = vmatprep.subr.bf16.mxu0 0
    %153 = vmatpush1.bf16.msra.mxu0 0
    %154 = vmatprep.subr.bf16.mxu0 0
    %155 = vmatpush1.bf16.msra.mxu0 0
    %156 = vmatprep.subr.bf16.mxu0 0
    %157 = vmatpush1.bf16.msra.mxu0 0
    %158 = vmatprep.subr.bf16.mxu0 0
    %159 = vmatpush1.bf16.msra.mxu0 0
    %160 = vmatprep.subr.bf16.mxu0 0
    %161 = vmatpush1.bf16.msra.mxu0 0
    %162 = vmatprep.mubr.bf16.mxu0 0
    %163 = vmatmul.mubr.bf16.gmra.mrb[0].mxu0 %v74
    %v164 = vpop.f32.mrb[0].mxu0
    %v165 = vadd.f32 0.0, %v164
    %v166 = vpop.f32.mrb[0].mxu0
    %v167 = vadd.f32 0.0, %v166
    %v168 = vpop.f32.mrb[0].mxu0
    %v169 = vpop.f32.mrb[0].mxu0
    %170 = vdwg.mxu0
    %v175 = vunpack.c.l.b16 %v48
    %v176 = vunpack.c.h.b16 %v48
    %v177 = vunpack.c.l.b16 %v49
    %v178 = vunpack.c.h.b16 %v49
    %v179 = vunpack.c.l.b16 %v50
    %v180 = vunpack.c.h.b16 %v50
    %v181 = vunpack.c.l.b16 %v51
    %v182 = vunpack.c.h.b16 %v51
    %v183 = vpack.c.b16 %v179, %v175
    %v184 = vpack.c.b16 %v180, %v176
    %v185 = vpack.c.b16 %v181, %v177
    %v186 = vpack.c.b16 %v182, %v178
    %vm191 = vcmask 130048
    %v193 = vsel %vm191, %v47, 0
    %195 = vmatprep.subr.bf16.mxu0 %v184
    %196 = vmatpush1.bf16.msra.mxu0 %v183
    %197 = vmatprep.subr.bf16.mxu0 0
    %198 = vmatpush1.bf16.msra.mxu0 0
    %199 = vmatprep.subr.bf16.mxu0 0
    %200 = vmatpush1.bf16.msra.mxu0 0
    %201 = vmatprep.subr.bf16.mxu0 0
    %202 = vmatpush1.bf16.msra.mxu0 0
    %203 = vmatprep.subr.bf16.mxu0 0
    %204 = vmatpush1.bf16.msra.mxu0 0
    %205 = vmatprep.subr.bf16.mxu0 0
    %206 = vmatpush1.bf16.msra.mxu0 0
    %207 = vmatprep.subr.bf16.mxu0 0
    %208 = vmatpush1.bf16.msra.mxu0 0
    %209 = vmatprep.subr.bf16.mxu0 0
    %210 = vmatpush1.bf16.msra.mxu0 0
    %211 = vmatprep.subr.bf16.mxu0 0
    %212 = vmatpush1.bf16.msra.mxu0 0
    %213 = vmatprep.subr.bf16.mxu0 0
    %214 = vmatpush1.bf16.msra.mxu0 0
    %215 = vmatprep.subr.bf16.mxu0 0
    %216 = vmatpush1.bf16.msra.mxu0 0
    %217 = vmatprep.subr.bf16.mxu0 0
    %218 = vmatpush1.bf16.msra.mxu0 0
    %219 = vmatprep.subr.bf16.mxu0 0
    %220 = vmatpush1.bf16.msra.mxu0 0
    %221 = vmatprep.subr.bf16.mxu0 0
    %222 = vmatpush1.bf16.msra.mxu0 0
    %223 = vmatprep.subr.bf16.mxu0 0
    %224 = vmatpush1.bf16.msra.mxu0 0
    %225 = vmatprep.subr.bf16.mxu0 0
    %226 = vmatpush1.bf16.msra.mxu0 0
    %227 = vmatprep.mubr.bf16.mxu0 0
    %228 = vmatmul.mubr.bf16.gmra.mrb[0].mxu0 %v193
    %v229 = vpop.f32.mrb[0].mxu0
    %v230 = vadd.f32 %v124, %v229
    %v231 = vpop.f32.mrb[0].mxu0
    %v232 = vadd.f32 %v126, %v231
    %v233 = vpop.f32.mrb[0].mxu0
    %v234 = vpop.f32.mrb[0].mxu0
    %235 = vdwg.mxu0
    %236 = vmatprep.subr.bf16.mxu0 %v186
    %237 = vmatpush1.bf16.msra.mxu0 %v185
    %238 = vmatprep.subr.bf16.mxu0 0
    %239 = vmatpush1.bf16.msra.mxu0 0
    %240 = vmatprep.subr.bf16.mxu0 0
    %241 = vmatpush1.bf16.msra.mxu0 0
    %242 = vmatprep.subr.bf16.mxu0 0
    %243 = vmatpush1.bf16.msra.mxu0 0
    %244 = vmatprep.subr.bf16.mxu0 0
    %245 = vmatpush1.bf16.msra.mxu0 0
    %246 = vmatprep.subr.bf16.mxu0 0
    %247 = vmatpush1.bf16.msra.mxu0 0
    %248 = vmatprep.subr.bf16.mxu0 0
    %249 = vmatpush1.bf16.msra.mxu0 0
    %250 = vmatprep.subr.bf16.mxu0 0
    %251 = vmatpush1.bf16.msra.mxu0 0
    %252 = vmatprep.subr.bf16.mxu0 0
    %253 = vmatpush1.bf16.msra.mxu0 0
    %254 = vmatprep.subr.bf16.mxu0 0
    %255 = vmatpush1.bf16.msra.mxu0 0
    %256 = vmatprep.subr.bf16.mxu0 0
    %257 = vmatpush1.bf16.msra.mxu0 0
    %258 = vmatprep.subr.bf16.mxu0 0
    %259 = vmatpush1.bf16.msra.mxu0 0
    %260 = vmatprep.subr.bf16.mxu0 0
    %261 = vmatpush1.bf16.msra.mxu0 0
    %262 = vmatprep.subr.bf16.mxu0 0
    %263 = vmatpush1.bf16.msra.mxu0 0
    %264 = vmatprep.subr.bf16.mxu0 0
    %265 = vmatpush1.bf16.msra.mxu0 0
    %266 = vmatprep.subr.bf16.mxu0 0
    %267 = vmatpush1.bf16.msra.mxu0 0
    %268 = vmatprep.mubr.bf16.mxu0 0
    %269 = vmatmul.mubr.bf16.gmra.mrb[0].mxu0 %v193
    %v270 = vpop.f32.mrb[0].mxu0
    %v271 = vadd.f32 %v165, %v270
    %v272 = vpop.f32.mrb[0].mxu0
    %v273 = vadd.f32 %v167, %v272
    %v274 = vpop.f32.mrb[0].mxu0
    %v275 = vpop.f32.mrb[0].mxu0
    %276 = vdwg.mxu0
    %v277 = vld [vmem:[%s4] sm:$0xf]
    %v279 = vlaneseq
    %v280 = vshrl.u32 %v279, 7
    %v281 = vsub.s32 0, %v280
    %v282 = vrot.slane %v277, %v281
    %v283 = vlaneseq
    %v284 = vshrl.u32 %v283, 7
    %v285 = vsub.s32 1, %v284
    %v286 = vrot.slane %v277, %v285
    %v287 = vlaneseq
    %v288 = vshrl.u32 %v287, 7
    %v289 = vsub.s32 2, %v288
    %v290 = vrot.slane %v277, %v289
    %v291 = vlaneseq
    %v292 = vshrl.u32 %v291, 7
    %v293 = vsub.s32 3, %v292
    %v294 = vrot.slane %v277, %v293
    %v299 = vadd.f32 %v230, %v282
    %v300 = vadd.f32 %v232, %v286
    %v301 = vadd.f32 %v271, %v290
    %v302 = vadd.f32 %v273, %v294
    %v303 = vmax.f32 %v299, 0.0
    %v304 = vmax.f32 %v300, 0.0
    %v305 = vmax.f32 %v301, 0.0
    %v306 = vmax.f32 %v302, 0.0
    %v307 = vpack.c.bf16 %v303, %v303
    %v308 = vpack.c.bf16 %v304, %v304
    %v309 = vpack.c.bf16 %v305, %v305
    %v310 = vpack.c.bf16 %v306, %v306
    %v311 = vld [vmem:[#allocation2] sm:$0xff]
    %v312 = vld [vmem:[#allocation2 + $0x8] sm:$0xff]
    %v313 = vld [vmem:[#allocation2 + $0x10] sm:$0xff]
    %v314 = vld [vmem:[#allocation2 + $0x18] sm:$0xff]
    %v315 = vld [vmem:[#allocation2 + $0x20] sm:$0xff]
    %v316 = vld [vmem:[#allocation2 + $0x28] sm:$0xff]
    %v317 = vld [vmem:[#allocation2 + $0x30] sm:$0xff]
    %v318 = vld [vmem:[#allocation2 + $0x38] sm:$0xff]
    %v319 = vld [vmem:[#allocation2 + $0x40] sm:$0xff]
    %v320 = vld [vmem:[#allocation2 + $0x48] sm:$0xff]
    %v321 = vld [vmem:[#allocation2 + $0x50] sm:$0xff]
    %v322 = vld [vmem:[#allocation2 + $0x58] sm:$0xff]
    %v323 = vld [vmem:[#allocation2 + $0x60] sm:$0xff]
    %v324 = vld [vmem:[#allocation2 + $0x68] sm:$0xff]
    %v325 = vld [vmem:[#allocation2 + $0x70] sm:$0xff]
    %v326 = vld [vmem:[#allocation2 + $0x78] sm:$0xff]
    %v327 = vld [vmem:[#allocation2 + $0x80] sm:$0xff]
    %v328 = vld [vmem:[#allocation2 + $0x88] sm:$0xff]
    %v329 = vld [vmem:[#allocation2 + $0x90] sm:$0xff]
    %v330 = vld [vmem:[#allocation2 + $0x98] sm:$0xff]
    %v331 = vld [vmem:[#allocation2 + $0xa0] sm:$0xff]
    %v332 = vld [vmem:[#allocation2 + $0xa8] sm:$0xff]
    %v333 = vld [vmem:[#allocation2 + $0xb0] sm:$0xff]
    %v334 = vld [vmem:[#allocation2 + $0xb8] sm:$0xff]
    %v335 = vld [vmem:[#allocation2 + $0xc0] sm:$0xff]
    %v336 = vld [vmem:[#allocation2 + $0xc8] sm:$0xff]
    %v337 = vld [vmem:[#allocation2 + $0xd0] sm:$0xff]
    %v338 = vld [vmem:[#allocation2 + $0xd8] sm:$0xff]
    %v339 = vld [vmem:[#allocation2 + $0xe0] sm:$0xff]
    %v340 = vld [vmem:[#allocation2 + $0xe8] sm:$0xff]
    %v341 = vld [vmem:[#allocation2 + $0xf0] sm:$0xff]
    %v342 = vld [vmem:[#allocation2 + $0xf8] sm:$0xff]
    %v343 = vld [vmem:[#allocation2 + $0x100] sm:$0xff]
    %v344 = vld [vmem:[#allocation2 + $0x108] sm:$0xff]
    %v345 = vld [vmem:[#allocation2 + $0x110] sm:$0xff]
    %v346 = vld [vmem:[#allocation2 + $0x118] sm:$0xff]
    %v347 = vld [vmem:[#allocation2 + $0x120] sm:$0xff]
    %v348 = vld [vmem:[#allocation2 + $0x128] sm:$0xff]
    %v349 = vld [vmem:[#allocation2 + $0x130] sm:$0xff]
    %v350 = vld [vmem:[#allocation2 + $0x138] sm:$0xff]
    %v351 = vld [vmem:[#allocation2 + $0x140] sm:$0xff]
    %v352 = vld [vmem:[#allocation2 + $0x148] sm:$0xff]
    %v353 = vld [vmem:[#allocation2 + $0x150] sm:$0xff]
    %v354 = vld [vmem:[#allocation2 + $0x158] sm:$0xff]
    %v355 = vld [vmem:[#allocation2 + $0x160] sm:$0xff]
    %v356 = vld [vmem:[#allocation2 + $0x168] sm:$0xff]
    %v357 = vld [vmem:[#allocation2 + $0x170] sm:$0xff]
    %v358 = vld [vmem:[#allocation2 + $0x178] sm:$0xff]
    %v359 = vld [vmem:[#allocation2 + $0x180] sm:$0xff]
    %v360 = vld [vmem:[#allocation2 + $0x188] sm:$0xff]
    %v361 = vld [vmem:[#allocation2 + $0x190] sm:$0xff]
    %v362 = vld [vmem:[#allocation2 + $0x198] sm:$0xff]
    %v363 = vld [vmem:[#allocation2 + $0x1a0] sm:$0xff]
    %v364 = vld [vmem:[#allocation2 + $0x1a8] sm:$0xff]
    %v365 = vld [vmem:[#allocation2 + $0x1b0] sm:$0xff]
    %v366 = vld [vmem:[#allocation2 + $0x1b8] sm:$0xff]
    %v367 = vld [vmem:[#allocation2 + $0x1c0] sm:$0xff]
    %v368 = vld [vmem:[#allocation2 + $0x1c8] sm:$0xff]
    %v369 = vld [vmem:[#allocation2 + $0x1d0] sm:$0xff]
    %v370 = vld [vmem:[#allocation2 + $0x1d8] sm:$0xff]
    %v371 = vld [vmem:[#allocation2 + $0x1e0] sm:$0xff]
    %v372 = vld [vmem:[#allocation2 + $0x1e8] sm:$0xff]
    %v373 = vld [vmem:[#allocation2 + $0x1f0] sm:$0xff]
    %v374 = vld [vmem:[#allocation2 + $0x1f8] sm:$0xff]
    %v375 = vld [vmem:[#allocation2 + $0x200] sm:$0xff]
    %v376 = vld [vmem:[#allocation2 + $0x208] sm:$0xff]
    %v377 = vld [vmem:[#allocation2 + $0x210] sm:$0xff]
    %v378 = vld [vmem:[#allocation2 + $0x218] sm:$0xff]
    %v379 = vld [vmem:[#allocation2 + $0x220] sm:$0xff]
    %v380 = vld [vmem:[#allocation2 + $0x228] sm:$0xff]
    %v381 = vld [vmem:[#allocation2 + $0x230] sm:$0xff]
    %v382 = vld [vmem:[#allocation2 + $0x238] sm:$0xff]
    %v383 = vld [vmem:[#allocation2 + $0x240] sm:$0xff]
    %v384 = vld [vmem:[#allocation2 + $0x248] sm:$0xff]
    %v385 = vld [vmem:[#allocation2 + $0x250] sm:$0xff]
    %v386 = vld [vmem:[#allocation2 + $0x258] sm:$0xff]
    %v387 = vld [vmem:[#allocation2 + $0x260] sm:$0xff]
    %v388 = vld [vmem:[#allocation2 + $0x268] sm:$0xff]
    %v389 = vld [vmem:[#allocation2 + $0x270] sm:$0xff]
    %v390 = vld [vmem:[#allocation2 + $0x278] sm:$0xff]
    %v391 = vld [vmem:[#allocation2 + $0x280] sm:$0xff]
    %v392 = vld [vmem:[#allocation2 + $0x288] sm:$0xff]
    %v393 = vld [vmem:[#allocation2 + $0x290] sm:$0xff]
    %v394 = vld [vmem:[#allocation2 + $0x298] sm:$0xff]
    %v395 = vld [vmem:[#allocation2 + $0x2a0] sm:$0xff]
    %v396 = vld [vmem:[#allocation2 + $0x2a8] sm:$0xff]
    %v397 = vld [vmem:[#allocation2 + $0x2b0] sm:$0xff]
    %v398 = vld [vmem:[#allocation2 + $0x2b8] sm:$0xff]
    %v399 = vld [vmem:[#allocation2 + $0x2c0] sm:$0xff]
    %v400 = vld [vmem:[#allocation2 + $0x2c8] sm:$0xff]
    %v401 = vld [vmem:[#allocation2 + $0x2d0] sm:$0xff]
    %v402 = vld [vmem:[#allocation2 + $0x2d8] sm:$0xff]
    %v403 = vld [vmem:[#allocation2 + $0x2e0] sm:$0xff]
    %v404 = vld [vmem:[#allocation2 + $0x2e8] sm:$0xff]
    %v405 = vld [vmem:[#allocation2 + $0x2f0] sm:$0xff]
    %v406 = vld [vmem:[#allocation2 + $0x2f8] sm:$0xff]
    %v407 = vld [vmem:[#allocation2 + $0x300] sm:$0xff]
    %v408 = vld [vmem:[#allocation2 + $0x308] sm:$0xff]
    %v409 = vld [vmem:[#allocation2 + $0x310] sm:$0xff]
    %v410 = vld [vmem:[#allocation2 + $0x318] sm:$0xff]
    %v411 = vld [vmem:[#allocation2 + $0x320] sm:$0xff]
    %v412 = vld [vmem:[#allocation2 + $0x328] sm:$0xff]
    %v413 = vld [vmem:[#allocation2 + $0x330] sm:$0xff]
    %v414 = vld [vmem:[#allocation2 + $0x338] sm:$0xff]
    %v415 = vld [vmem:[#allocation2 + $0x340] sm:$0xff]
    %v416 = vld [vmem:[#allocation2 + $0x348] sm:$0xff]
    %v417 = vld [vmem:[#allocation2 + $0x350] sm:$0xff]
    %v418 = vld [vmem:[#allocation2 + $0x358] sm:$0xff]
    %v419 = vld [vmem:[#allocation2 + $0x360] sm:$0xff]
    %v420 = vld [vmem:[#allocation2 + $0x368] sm:$0xff]
    %v421 = vld [vmem:[#allocation2 + $0x370] sm:$0xff]
    %v422 = vld [vmem:[#allocation2 + $0x378] sm:$0xff]
    %v423 = vld [vmem:[#allocation2 + $0x380] sm:$0xff]
    %v424 = vld [vmem:[#allocation2 + $0x388] sm:$0xff]
    %v425 = vld [vmem:[#allocation2 + $0x390] sm:$0xff]
    %v426 = vld [vmem:[#allocation2 + $0x398] sm:$0xff]
    %v427 = vld [vmem:[#allocation2 + $0x3a0] sm:$0xff]
    %v428 = vld [vmem:[#allocation2 + $0x3a8] sm:$0xff]
    %v429 = vld [vmem:[#allocation2 + $0x3b0] sm:$0xff]
    %v430 = vld [vmem:[#allocation2 + $0x3b8] sm:$0xff]
    %v431 = vld [vmem:[#allocation2 + $0x3c0] sm:$0xff]
    %v432 = vld [vmem:[#allocation2 + $0x3c8] sm:$0xff]
    %v433 = vld [vmem:[#allocation2 + $0x3d0] sm:$0xff]
    %v434 = vld [vmem:[#allocation2 + $0x3d8] sm:$0xff]
    %v435 = vld [vmem:[#allocation2 + $0x3e0] sm:$0xff]
    %v436 = vld [vmem:[#allocation2 + $0x3e8] sm:$0xff]
    %v437 = vld [vmem:[#allocation2 + $0x3f0] sm:$0xff]
    %v438 = vld [vmem:[#allocation2 + $0x3f8] sm:$0xff]
    %v439 = vld [vmem:[%s6] sm:$0xf]
    %v441 = vlaneseq
    %v442 = vshrl.u32 %v441, 7
    %v443 = vsub.s32 0, %v442
    %v444 = vrot.slane %v439, %v443
    %v445 = vlaneseq
    %v446 = vshrl.u32 %v445, 7
    %v447 = vsub.s32 1, %v446
    %v448 = vrot.slane %v439, %v447
    %v449 = vlaneseq
    %v450 = vshrl.u32 %v449, 7
    %v451 = vsub.s32 2, %v450
    %v452 = vrot.slane %v439, %v451
    %v453 = vlaneseq
    %v454 = vshrl.u32 %v453, 7
    %v455 = vsub.s32 3, %v454
    %v456 = vrot.slane %v439, %v455
    %v589 = vunpack.c.l.b16 %v311
    %v590 = vunpack.c.h.b16 %v311
    %v591 = vunpack.c.l.b16 %v312
    %v592 = vunpack.c.h.b16 %v312
    %v593 = vunpack.c.l.b16 %v313
    %v594 = vunpack.c.h.b16 %v313
    %v595 = vunpack.c.l.b16 %v314
    %v596 = vunpack.c.h.b16 %v314
    %v597 = vunpack.c.l.b16 %v315
    %v598 = vunpack.c.h.b16 %v315
    %v599 = vunpack.c.l.b16 %v316
    %v600 = vunpack.c.h.b16 %v316
    %v601 = vunpack.c.l.b16 %v317
    %v602 = vunpack.c.h.b16 %v317
    %v603 = vunpack.c.l.b16 %v318
    %v604 = vunpack.c.h.b16 %v318
    %v605 = vunpack.c.l.b16 %v319
    %v606 = vunpack.c.h.b16 %v319
    %v607 = vunpack.c.l.b16 %v320
    %v608 = vunpack.c.h.b16 %v320
    %v609 = vunpack.c.l.b16 %v321
    %v610 = vunpack.c.h.b16 %v321
    %v611 = vunpack.c.l.b16 %v322
    %v612 = vunpack.c.h.b16 %v322
    %v613 = vunpack.c.l.b16 %v323
    %v614 = vunpack.c.h.b16 %v323
    %v615 = vunpack.c.l.b16 %v324
    %v616 = vunpack.c.h.b16 %v324
    %v617 = vunpack.c.l.b16 %v325
    %v618 = vunpack.c.h.b16 %v325
    %v619 = vunpack.c.l.b16 %v326
    %v620 = vunpack.c.h.b16 %v326
    %v621 = vunpack.c.l.b16 %v327
    %v622 = vunpack.c.h.b16 %v327
    %v623 = vunpack.c.l.b16 %v328
    %v624 = vunpack.c.h.b16 %v328
    %v625 = vunpack.c.l.b16 %v329
    %v626 = vunpack.c.h.b16 %v329
    %v627 = vunpack.c.l.b16 %v330
    %v628 = vunpack.c.h.b16 %v330
    %v629 = vunpack.c.l.b16 %v331
    %v630 = vunpack.c.h.b16 %v331
    %v631 = vunpack.c.l.b16 %v332
    %v632 = vunpack.c.h.b16 %v332
    %v633 = vunpack.c.l.b16 %v333
    %v634 = vunpack.c.h.b16 %v333
    %v635 = vunpack.c.l.b16 %v334
    %v636 = vunpack.c.h.b16 %v334
    %v637 = vunpack.c.l.b16 %v335
    %v638 = vunpack.c.h.b16 %v335
    %v639 = vunpack.c.l.b16 %v336
    %v640 = vunpack.c.h.b16 %v336
    %v641 = vunpack.c.l.b16 %v337
    %v642 = vunpack.c.h.b16 %v337
    %v643 = vunpack.c.l.b16 %v338
    %v644 = vunpack.c.h.b16 %v338
    %v645 = vunpack.c.l.b16 %v339
    %v646 = vunpack.c.h.b16 %v339
    %v647 = vunpack.c.l.b16 %v340
    %v648 = vunpack.c.h.b16 %v340
    %v649 = vunpack.c.l.b16 %v341
    %v650 = vunpack.c.h.b16 %v341
    %v651 = vunpack.c.l.b16 %v342
    %v652 = vunpack.c.h.b16 %v342
    %v653 = vunpack.c.l.b16 %v343
    %v654 = vunpack.c.h.b16 %v343
    %v655 = vunpack.c.l.b16 %v344
    %v656 = vunpack.c.h.b16 %v344
    %v657 = vunpack.c.l.b16 %v345
    %v658 = vunpack.c.h.b16 %v345
    %v659 = vunpack.c.l.b16 %v346
    %v660 = vunpack.c.h.b16 %v346
    %v661 = vunpack.c.l.b16 %v347
    %v662 = vunpack.c.h.b16 %v347
    %v663 = vunpack.c.l.b16 %v348
    %v664 = vunpack.c.h.b16 %v348
    %v665 = vunpack.c.l.b16 %v349
    %v666 = vunpack.c.h.b16 %v349
    %v667 = vunpack.c.l.b16 %v350
    %v668 = vunpack.c.h.b16 %v350
    %v669 = vunpack.c.l.b16 %v351
    %v670 = vunpack.c.h.b16 %v351
    %v671 = vunpack.c.l.b16 %v352
    %v672 = vunpack.c.h.b16 %v352
    %v673 = vunpack.c.l.b16 %v353
    %v674 = vunpack.c.h.b16 %v353
    %v675 = vunpack.c.l.b16 %v354
    %v676 = vunpack.c.h.b16 %v354
    %v677 = vunpack.c.l.b16 %v355
    %v678 = vunpack.c.h.b16 %v355
    %v679 = vunpack.c.l.b16 %v356
    %v680 = vunpack.c.h.b16 %v356
    %v681 = vunpack.c.l.b16 %v357
    %v682 = vunpack.c.h.b16 %v357
    %v683 = vunpack.c.l.b16 %v358
    %v684 = vunpack.c.h.b16 %v358
    %v685 = vunpack.c.l.b16 %v359
    %v686 = vunpack.c.h.b16 %v359
    %v687 = vunpack.c.l.b16 %v360
    %v688 = vunpack.c.h.b16 %v360
    %v689 = vunpack.c.l.b16 %v361
    %v690 = vunpack.c.h.b16 %v361
    %v691 = vunpack.c.l.b16 %v362
    %v692 = vunpack.c.h.b16 %v362
    %v693 = vunpack.c.l.b16 %v363
    %v694 = vunpack.c.h.b16 %v363
    %v695 = vunpack.c.l.b16 %v364
    %v696 = vunpack.c.h.b16 %v364
    %v697 = vunpack.c.l.b16 %v365
    %v698 = vunpack.c.h.b16 %v365
    %v699 = vunpack.c.l.b16 %v366
    %v700 = vunpack.c.h.b16 %v366
    %v701 = vunpack.c.l.b16 %v367
    %v702 = vunpack.c.h.b16 %v367
    %v703 = vunpack.c.l.b16 %v368
    %v704 = vunpack.c.h.b16 %v368
    %v705 = vunpack.c.l.b16 %v369
    %v706 = vunpack.c.h.b16 %v369
    %v707 = vunpack.c.l.b16 %v370
    %v708 = vunpack.c.h.b16 %v370
    %v709 = vunpack.c.l.b16 %v371
    %v710 = vunpack.c.h.b16 %v371
    %v711 = vunpack.c.l.b16 %v372
    %v712 = vunpack.c.h.b16 %v372
    %v713 = vunpack.c.l.b16 %v373
    %v714 = vunpack.c.h.b16 %v373
    %v715 = vunpack.c.l.b16 %v374
    %v716 = vunpack.c.h.b16 %v374
    %v717 = vunpack.c.l.b16 %v375
    %v718 = vunpack.c.h.b16 %v375
    %v719 = vunpack.c.l.b16 %v376
    %v720 = vunpack.c.h.b16 %v376
    %v721 = vunpack.c.l.b16 %v377
    %v722 = vunpack.c.h.b16 %v377
    %v723 = vunpack.c.l.b16 %v378
    %v724 = vunpack.c.h.b16 %v378
    %v725 = vunpack.c.l.b16 %v379
    %v726 = vunpack.c.h.b16 %v379
    %v727 = vunpack.c.l.b16 %v380
    %v728 = vunpack.c.h.b16 %v380
    %v729 = vunpack.c.l.b16 %v381
    %v730 = vunpack.c.h.b16 %v381
    %v731 = vunpack.c.l.b16 %v382
    %v732 = vunpack.c.h.b16 %v382
    %v733 = vunpack.c.l.b16 %v383
    %v734 = vunpack.c.h.b16 %v383
    %v735 = vunpack.c.l.b16 %v384
    %v736 = vunpack.c.h.b16 %v384
    %v737 = vunpack.c.l.b16 %v385
    %v738 = vunpack.c.h.b16 %v385
    %v739 = vunpack.c.l.b16 %v386
    %v740 = vunpack.c.h.b16 %v386
    %v741 = vunpack.c.l.b16 %v387
    %v742 = vunpack.c.h.b16 %v387
    %v743 = vunpack.c.l.b16 %v388
    %v744 = vunpack.c.h.b16 %v388
    %v745 = vunpack.c.l.b16 %v389
    %v746 = vunpack.c.h.b16 %v389
    %v747 = vunpack.c.l.b16 %v390
    %v748 = vunpack.c.h.b16 %v390
    %v749 = vunpack.c.l.b16 %v391
    %v750 = vunpack.c.h.b16 %v391
    %v751 = vunpack.c.l.b16 %v392
    %v752 = vunpack.c.h.b16 %v392
    %v753 = vunpack.c.l.b16 %v393
    %v754 = vunpack.c.h.b16 %v393
    %v755 = vunpack.c.l.b16 %v394
    %v756 = vunpack.c.h.b16 %v394
    %v757 = vunpack.c.l.b16 %v395
    %v758 = vunpack.c.h.b16 %v395
    %v759 = vunpack.c.l.b16 %v396
    %v760 = vunpack.c.h.b16 %v396
    %v761 = vunpack.c.l.b16 %v397
    %v762 = vunpack.c.h.b16 %v397
    %v763 = vunpack.c.l.b16 %v398
    %v764 = vunpack.c.h.b16 %v398
    %v765 = vunpack.c.l.b16 %v399
    %v766 = vunpack.c.h.b16 %v399
    %v767 = vunpack.c.l.b16 %v400
    %v768 = vunpack.c.h.b16 %v400
    %v769 = vunpack.c.l.b16 %v401
    %v770 = vunpack.c.h.b16 %v401
    %v771 = vunpack.c.l.b16 %v402
    %v772 = vunpack.c.h.b16 %v402
    %v773 = vunpack.c.l.b16 %v403
    %v774 = vunpack.c.h.b16 %v403
    %v775 = vunpack.c.l.b16 %v404
    %v776 = vunpack.c.h.b16 %v404
    %v777 = vunpack.c.l.b16 %v405
    %v778 = vunpack.c.h.b16 %v405
    %v779 = vunpack.c.l.b16 %v406
    %v780 = vunpack.c.h.b16 %v406
    %v781 = vunpack.c.l.b16 %v407
    %v782 = vunpack.c.h.b16 %v407
    %v783 = vunpack.c.l.b16 %v408
    %v784 = vunpack.c.h.b16 %v408
    %v785 = vunpack.c.l.b16 %v409
    %v786 = vunpack.c.h.b16 %v409
    %v787 = vunpack.c.l.b16 %v410
    %v788 = vunpack.c.h.b16 %v410
    %v789 = vunpack.c.l.b16 %v411
    %v790 = vunpack.c.h.b16 %v411
    %v791 = vunpack.c.l.b16 %v412
    %v792 = vunpack.c.h.b16 %v412
    %v793 = vunpack.c.l.b16 %v413
    %v794 = vunpack.c.h.b16 %v413
    %v795 = vunpack.c.l.b16 %v414
    %v796 = vunpack.c.h.b16 %v414
    %v797 = vunpack.c.l.b16 %v415
    %v798 = vunpack.c.h.b16 %v415
    %v799 = vunpack.c.l.b16 %v416
    %v800 = vunpack.c.h.b16 %v416
    %v801 = vunpack.c.l.b16 %v417
    %v802 = vunpack.c.h.b16 %v417
    %v803 = vunpack.c.l.b16 %v418
    %v804 = vunpack.c.h.b16 %v418
    %v805 = vunpack.c.l.b16 %v419
    %v806 = vunpack.c.h.b16 %v419
    %v807 = vunpack.c.l.b16 %v420
    %v808 = vunpack.c.h.b16 %v420
    %v809 = vunpack.c.l.b16 %v421
    %v810 = vunpack.c.h.b16 %v421
    %v811 = vunpack.c.l.b16 %v422
    %v812 = vunpack.c.h.b16 %v422
    %v813 = vunpack.c.l.b16 %v423
    %v814 = vunpack.c.h.b16 %v423
    %v815 = vunpack.c.l.b16 %v424
    %v816 = vunpack.c.h.b16 %v424
    %v817 = vunpack.c.l.b16 %v425
    %v818 = vunpack.c.h.b16 %v425
    %v819 = vunpack.c.l.b16 %v426
    %v820 = vunpack.c.h.b16 %v426
    %v821 = vunpack.c.l.b16 %v427
    %v822 = vunpack.c.h.b16 %v427
    %v823 = vunpack.c.l.b16 %v428
    %v824 = vunpack.c.h.b16 %v428
    %v825 = vunpack.c.l.b16 %v429
    %v826 = vunpack.c.h.b16 %v429
    %v827 = vunpack.c.l.b16 %v430
    %v828 = vunpack.c.h.b16 %v430
    %v829 = vunpack.c.l.b16 %v431
    %v830 = vunpack.c.h.b16 %v431
    %v831 = vunpack.c.l.b16 %v432
    %v832 = vunpack.c.h.b16 %v432
    %v833 = vunpack.c.l.b16 %v433
    %v834 = vunpack.c.h.b16 %v433
    %v835 = vunpack.c.l.b16 %v434
    %v836 = vunpack.c.h.b16 %v434
    %v837 = vunpack.c.l.b16 %v435
    %v838 = vunpack.c.h.b16 %v435
    %v839 = vunpack.c.l.b16 %v436
    %v840 = vunpack.c.h.b16 %v436
    %v841 = vunpack.c.l.b16 %v437
    %v842 = vunpack.c.h.b16 %v437
    %v843 = vunpack.c.l.b16 %v438
    %v844 = vunpack.c.h.b16 %v438
    %v845 = vpack.c.b16 %v593, %v589
    %v846 = vpack.c.b16 %v594, %v590
    %v847 = vpack.c.b16 %v595, %v591
    %v848 = vpack.c.b16 %v596, %v592
    %v849 = vpack.c.b16 %v601, %v597
    %v850 = vpack.c.b16 %v602, %v598
    %v851 = vpack.c.b16 %v603, %v599
    %v852 = vpack.c.b16 %v604, %v600
    %v853 = vpack.c.b16 %v609, %v605
    %v854 = vpack.c.b16 %v610, %v606
    %v855 = vpack.c.b16 %v611, %v607
    %v856 = vpack.c.b16 %v612, %v608
    %v857 = vpack.c.b16 %v617, %v613
    %v858 = vpack.c.b16 %v618, %v614
    %v859 = vpack.c.b16 %v619, %v615
    %v860 = vpack.c.b16 %v620, %v616
    %v861 = vpack.c.b16 %v625, %v621
    %v862 = vpack.c.b16 %v626, %v622
    %v863 = vpack.c.b16 %v627, %v623
    %v864 = vpack.c.b16 %v628, %v624
    %v865 = vpack.c.b16 %v633, %v629
    %v866 = vpack.c.b16 %v634, %v630
    %v867 = vpack.c.b16 %v635, %v631
    %v868 = vpack.c.b16 %v636, %v632
    %v869 = vpack.c.b16 %v641, %v637
    %v870 = vpack.c.b16 %v642, %v638
    %v871 = vpack.c.b16 %v643, %v639
    %v872 = vpack.c.b16 %v644, %v640
    %v873 = vpack.c.b16 %v649, %v645
    %v874 = vpack.c.b16 %v650, %v646
    %v875 = vpack.c.b16 %v651, %v647
    %v876 = vpack.c.b16 %v652, %v648
    %v877 = vpack.c.b16 %v657, %v653
    %v878 = vpack.c.b16 %v658, %v654
    %v879 = vpack.c.b16 %v659, %v655
    %v880 = vpack.c.b16 %v660, %v656
    %v881 = vpack.c.b16 %v665, %v661
    %v882 = vpack.c.b16 %v666, %v662
    %v883 = vpack.c.b16 %v667, %v663
    %v884 = vpack.c.b16 %v668, %v664
    %v885 = vpack.c.b16 %v673, %v669
    %v886 = vpack.c.b16 %v674, %v670
    %v887 = vpack.c.b16 %v675, %v671
    %v888 = vpack.c.b16 %v676, %v672
    %v889 = vpack.c.b16 %v681, %v677
    %v890 = vpack.c.b16 %v682, %v678
    %v891 = vpack.c.b16 %v683, %v679
    %v892 = vpack.c.b16 %v684, %v680
    %v893 = vpack.c.b16 %v689, %v685
    %v894 = vpack.c.b16 %v690, %v686
    %v895 = vpack.c.b16 %v691, %v687
    %v896 = vpack.c.b16 %v692, %v688
    %v897 = vpack.c.b16 %v697, %v693
    %v898 = vpack.c.b16 %v698, %v694
    %v899 = vpack.c.b16 %v699, %v695
    %v900 = vpack.c.b16 %v700, %v696
    %v901 = vpack.c.b16 %v705, %v701
    %v902 = vpack.c.b16 %v706, %v702
    %v903 = vpack.c.b16 %v707, %v703
    %v904 = vpack.c.b16 %v708, %v704
    %v905 = vpack.c.b16 %v713, %v709
    %v906 = vpack.c.b16 %v714, %v710
    %v907 = vpack.c.b16 %v715, %v711
    %v908 = vpack.c.b16 %v716, %v712
    %v909 = vpack.c.b16 %v721, %v717
    %v910 = vpack.c.b16 %v722, %v718
    %v911 = vpack.c.b16 %v723, %v719
    %v912 = vpack.c.b16 %v724, %v720
    %v913 = vpack.c.b16 %v729, %v725
    %v914 = vpack.c.b16 %v730, %v726
    %v915 = vpack.c.b16 %v731, %v727
    %v916 = vpack.c.b16 %v732, %v728
    %v917 = vpack.c.b16 %v737, %v733
    %v918 = vpack.c.b16 %v738, %v734
    %v919 = vpack.c.b16 %v739, %v735
    %v920 = vpack.c.b16 %v740, %v736
    %v921 = vpack.c.b16 %v745, %v741
    %v922 = vpack.c.b16 %v746, %v742
    %v923 = vpack.c.b16 %v747, %v743
    %v924 = vpack.c.b16 %v748, %v744
    %v925 = vpack.c.b16 %v753, %v749
    %v926 = vpack.c.b16 %v754, %v750
    %v927 = vpack.c.b16 %v755, %v751
    %v928 = vpack.c.b16 %v756, %v752
    %v929 = vpack.c.b16 %v761, %v757
    %v930 = vpack.c.b16 %v762, %v758
    %v931 = vpack.c.b16 %v763, %v759
    %v932 = vpack.c.b16 %v764, %v760
    %v933 = vpack.c.b16 %v769, %v765
    %v934 = vpack.c.b16 %v770, %v766
    %v935 = vpack.c.b16 %v771, %v767
    %v936 = vpack.c.b16 %v772, %v768
    %v937 = vpack.c.b16 %v777, %v773
    %v938 = vpack.c.b16 %v778, %v774
    %v939 = vpack.c.b16 %v779, %v775
    %v940 = vpack.c.b16 %v780, %v776
    %v941 = vpack.c.b16 %v785, %v781
    %v942 = vpack.c.b16 %v786, %v782
    %v943 = vpack.c.b16 %v787, %v783
    %v944 = vpack.c.b16 %v788, %v784
    %v945 = vpack.c.b16 %v793, %v789
    %v946 = vpack.c.b16 %v794, %v790
    %v947 = vpack.c.b16 %v795, %v791
    %v948 = vpack.c.b16 %v796, %v792
    %v949 = vpack.c.b16 %v801, %v797
    %v950 = vpack.c.b16 %v802, %v798
    %v951 = vpack.c.b16 %v803, %v799
    %v952 = vpack.c.b16 %v804, %v800
    %v953 = vpack.c.b16 %v809, %v805
    %v954 = vpack.c.b16 %v810, %v806
    %v955 = vpack.c.b16 %v811, %v807
    %v956 = vpack.c.b16 %v812, %v808
    %v957 = vpack.c.b16 %v817, %v813
    %v958 = vpack.c.b16 %v818, %v814
    %v959 = vpack.c.b16 %v819, %v815
    %v960 = vpack.c.b16 %v820, %v816
    %v961 = vpack.c.b16 %v825, %v821
    %v962 = vpack.c.b16 %v826, %v822
    %v963 = vpack.c.b16 %v827, %v823
    %v964 = vpack.c.b16 %v828, %v824
    %v965 = vpack.c.b16 %v833, %v829
    %v966 = vpack.c.b16 %v834, %v830
    %v967 = vpack.c.b16 %v835, %v831
    %v968 = vpack.c.b16 %v836, %v832
    %v969 = vpack.c.b16 %v841, %v837
    %v970 = vpack.c.b16 %v842, %v838
    %v971 = vpack.c.b16 %v843, %v839
    %v972 = vpack.c.b16 %v844, %v840
    %1101 = vmatprep.subr.bf16.mxu0 %v846
    %1102 = vmatpush1.bf16.msra.mxu0 %v845
    %1103 = vmatprep.subr.bf16.mxu0 %v850
    %1104 = vmatpush1.bf16.msra.mxu0 %v849
    %1105 = vmatprep.subr.bf16.mxu0 %v854
    %1106 = vmatpush1.bf16.msra.mxu0 %v853
    %1107 = vmatprep.subr.bf16.mxu0 %v858
    %1108 = vmatpush1.bf16.msra.mxu0 %v857
    %1109 = vmatprep.subr.bf16.mxu0 %v862
    %1110 = vmatpush1.bf16.msra.mxu0 %v861
    %1111 = vmatprep.subr.bf16.mxu0 %v866
    %1112 = vmatpush1.bf16.msra.mxu0 %v865
    %1113 = vmatprep.subr.bf16.mxu0 %v870
    %1114 = vmatpush1.bf16.msra.mxu0 %v869
    %1115 = vmatprep.subr.bf16.mxu0 %v874
    %1116 = vmatpush1.bf16.msra.mxu0 %v873
    %1117 = vmatprep.subr.bf16.mxu0 %v878
    %1118 = vmatpush1.bf16.msra.mxu0 %v877
    %1119 = vmatprep.subr.bf16.mxu0 %v882
    %1120 = vmatpush1.bf16.msra.mxu0 %v881
    %1121 = vmatprep.subr.bf16.mxu0 %v886
    %1122 = vmatpush1.bf16.msra.mxu0 %v885
    %1123 = vmatprep.subr.bf16.mxu0 %v890
    %1124 = vmatpush1.bf16.msra.mxu0 %v889
    %1125 = vmatprep.subr.bf16.mxu0 %v894
    %1126 = vmatpush1.bf16.msra.mxu0 %v893
    %1127 = vmatprep.subr.bf16.mxu0 %v898
    %1128 = vmatpush1.bf16.msra.mxu0 %v897
    %1129 = vmatprep.subr.bf16.mxu0 %v902
    %1130 = vmatpush1.bf16.msra.mxu0 %v901
    %1131 = vmatprep.subr.bf16.mxu0 %v906
    %1132 = vmatpush1.bf16.msra.mxu0 %v905
    %1133 = vmatprep.mubr.bf16.mxu0 %v308
    %1134 = vmatmul.mubr.bf16.gmra.mrb[0].mxu0 %v307
    %v1135 = vpop.f32.mrb[0].mxu0
    %v1136 = vadd.f32 %v444, %v1135
    %v1137 = vpop.f32.mrb[0].mxu0
    %v1138 = vadd.f32 %v448, %v1137
    %v1139 = vpop.f32.mrb[0].mxu0
    %v1140 = vpop.f32.mrb[0].mxu0
    %1141 = vdwg.mxu0
    %1142 = vmatprep.subr.bf16.mxu0 %v910
    %1143 = vmatpush1.bf16.msra.mxu0 %v909
    %1144 = vmatprep.subr.bf16.mxu0 %v914
    %1145 = vmatpush1.bf16.msra.mxu0 %v913
    %1146 = vmatprep.subr.bf16.mxu0 %v918
    %1147 = vmatpush1.bf16.msra.mxu0 %v917
    %1148 = vmatprep.subr.bf16.mxu0 %v922
    %1149 = vmatpush1.bf16.msra.mxu0 %v921
    %1150 = vmatprep.subr.bf16.mxu0 %v926
    %1151 = vmatpush1.bf16.msra.mxu0 %v925
    %1152 = vmatprep.subr.bf16.mxu0 %v930
    %1153 = vmatpush1.bf16.msra.mxu0 %v929
    %1154 = vmatprep.subr.bf16.mxu0 %v934
    %1155 = vmatpush1.bf16.msra.mxu0 %v933
    %1156 = vmatprep.subr.bf16.mxu0 %v938
    %1157 = vmatpush1.bf16.msra.mxu0 %v937
    %1158 = vmatprep.subr.bf16.mxu0 %v942
    %1159 = vmatpush1.bf16.msra.mxu0 %v941
    %1160 = vmatprep.subr.bf16.mxu0 %v946
    %1161 = vmatpush1.bf16.msra.mxu0 %v945
    %1162 = vmatprep.subr.bf16.mxu0 %v950
    %1163 = vmatpush1.bf16.msra.mxu0 %v949
    %1164 = vmatprep.subr.bf16.mxu0 %v954
    %1165 = vmatpush1.bf16.msra.mxu0 %v953
    %1166 = vmatprep.subr.bf16.mxu0 %v958
    %1167 = vmatpush1.bf16.msra.mxu0 %v957
    %1168 = vmatprep.subr.bf16.mxu0 %v962
    %1169 = vmatpush1.bf16.msra.mxu0 %v961
    %1170 = vmatprep.subr.bf16.mxu0 %v966
    %1171 = vmatpush1.bf16.msra.mxu0 %v965
    %1172 = vmatprep.subr.bf16.mxu0 %v970
    %1173 = vmatpush1.bf16.msra.mxu0 %v969
    %1174 = vmatprep.mubr.bf16.mxu0 %v310
    %1175 = vmatmul.mubr.bf16.gmra.mrb[0].mxu0 %v309
    %v1176 = vpop.f32.mrb[0].mxu0
    %v1177 = vadd.f32 %v1136, %v1176
    %v1178 = vpop.f32.mrb[0].mxu0
    %v1179 = vadd.f32 %v1138, %v1178
    %v1180 = vpop.f32.mrb[0].mxu0
    %v1181 = vpop.f32.mrb[0].mxu0
    %1182 = vdwg.mxu0
    %1183 = vmatprep.subr.bf16.mxu0 %v848
    %1184 = vmatpush1.bf16.msra.mxu0 %v847
    %1185 = vmatprep.subr.bf16.mxu0 %v852
    %1186 = vmatpush1.bf16.msra.mxu0 %v851
    %1187 = vmatprep.subr.bf16.mxu0 %v856
    %1188 = vmatpush1.bf16.msra.mxu0 %v855
    %1189 = vmatprep.subr.bf16.mxu0 %v860
    %1190 = vmatpush1.bf16.msra.mxu0 %v859
    %1191 = vmatprep.subr.bf16.mxu0 %v864
    %1192 = vmatpush1.bf16.msra.mxu0 %v863
    %1193 = vmatprep.subr.bf16.mxu0 %v868
    %1194 = vmatpush1.bf16.msra.mxu0 %v867
    %1195 = vmatprep.subr.bf16.mxu0 %v872
    %1196 = vmatpush1.bf16.msra.mxu0 %v871
    %1197 = vmatprep.subr.bf16.mxu0 %v876
    %1198 = vmatpush1.bf16.msra.mxu0 %v875
    %1199 = vmatprep.subr.bf16.mxu0 %v880
    %1200 = vmatpush1.bf16.msra.mxu0 %v879
    %1201 = vmatprep.subr.bf16.mxu0 %v884
    %1202 = vmatpush1.bf16.msra.mxu0 %v883
    %1203 = vmatprep.subr.bf16.mxu0 %v888
    %1204 = vmatpush1.bf16.msra.mxu0 %v887
    %1205 = vmatprep.subr.bf16.mxu0 %v892
    %1206 = vmatpush1.bf16.msra.mxu0 %v891
    %1207 = vmatprep.subr.bf16.mxu0 %v896
    %1208 = vmatpush1.bf16.msra.mxu0 %v895
    %1209 = vmatprep.subr.bf16.mxu0 %v900
    %1210 = vmatpush1.bf16.msra.mxu0 %v899
    %1211 = vmatprep.subr.bf16.mxu0 %v904
    %1212 = vmatpush1.bf16.msra.mxu0 %v903
    %1213 = vmatprep.subr.bf16.mxu0 %v908
    %1214 = vmatpush1.bf16.msra.mxu0 %v907
    %1215 = vmatprep.mubr.bf16.mxu0 %v308
    %1216 = vmatmul.mubr.bf16.gmra.mrb[0].mxu0 %v307
    %v1217 = vpop.f32.mrb[0].mxu0
    %v1218 = vadd.f32 %v452, %v1217
    %v1219 = vpop.f32.mrb[0].mxu0
    %v1220 = vadd.f32 %v456, %v1219
    %v1221 = vpop.f32.mrb[0].mxu0
    %v1222 = vpop.f32.mrb[0].mxu0
    %1223 = vdwg.mxu0
    %1224 = vmatprep.subr.bf16.mxu0 %v912
    %1225 = vmatpush1.bf16.msra.mxu0 %v911
    %1226 = vmatprep.subr.bf16.mxu0 %v916
    %1227 = vmatpush1.bf16.msra.mxu0 %v915
    %1228 = vmatprep.subr.bf16.mxu0 %v920
    %1229 = vmatpush1.bf16.msra.mxu0 %v919
    %1230 = vmatprep.subr.bf16.mxu0 %v924
    %1231 = vmatpush1.bf16.msra.mxu0 %v923
    %1232 = vmatprep.subr.bf16.mxu0 %v928
    %1233 = vmatpush1.bf16.msra.mxu0 %v927
    %1234 = vmatprep.subr.bf16.mxu0 %v932
    %1235 = vmatpush1.bf16.msra.mxu0 %v931
    %1236 = vmatprep.subr.bf16.mxu0 %v936
    %1237 = vmatpush1.bf16.msra.mxu0 %v935
    %1238 = vmatprep.subr.bf16.mxu0 %v940
    %1239 = vmatpush1.bf16.msra.mxu0 %v939
    %1240 = vmatprep.subr.bf16.mxu0 %v944
    %1241 = vmatpush1.bf16.msra.mxu0 %v943
    %1242 = vmatprep.subr.bf16.mxu0 %v948
    %1243 = vmatpush1.bf16.msra.mxu0 %v947
    %1244 = vmatprep.subr.bf16.mxu0 %v952
    %1245 = vmatpush1.bf16.msra.mxu0 %v951
    %1246 = vmatprep.subr.bf16.mxu0 %v956
    %1247 = vmatpush1.bf16.msra.mxu0 %v955
    %1248 = vmatprep.subr.bf16.mxu0 %v960
    %1249 = vmatpush1.bf16.msra.mxu0 %v959
    %1250 = vmatprep.subr.bf16.mxu0 %v964
    %1251 = vmatpush1.bf16.msra.mxu0 %v963
    %1252 = vmatprep.subr.bf16.mxu0 %v968
    %1253 = vmatpush1.bf16.msra.mxu0 %v967
    %1254 = vmatprep.subr.bf16.mxu0 %v972
    %1255 = vmatpush1.bf16.msra.mxu0 %v971
    %1256 = vmatprep.mubr.bf16.mxu0 %v310
    %1257 = vmatmul.mubr.bf16.gmra.mrb[0].mxu0 %v309
    %v1258 = vpop.f32.mrb[0].mxu0
    %v1259 = vadd.f32 %v1218, %v1258
    %v1260 = vpop.f32.mrb[0].mxu0
    %v1261 = vadd.f32 %v1220, %v1260
    %v1262 = vpop.f32.mrb[0].mxu0
    %v1263 = vpop.f32.mrb[0].mxu0
    %1264 = vdwg.mxu0
    %v1265 = vmax.f32 %v1177, 0.0
    %v1266 = vmax.f32 %v1179, 0.0
    %v1267 = vmax.f32 %v1259, 0.0
    %v1268 = vmax.f32 %v1261, 0.0
    %v1269 = vpack.c.bf16 %v1265, %v1265
    %v1270 = vpack.c.bf16 %v1266, %v1266
    %v1271 = vpack.c.bf16 %v1267, %v1267
    %v1272 = vpack.c.bf16 %v1268, %v1268
    %v1273 = vld [vmem:[%s7] sm:$0xf]
    %v1274 = vld [vmem:[%s7 + $0x4] sm:$0xf]
    %v1275 = vld [vmem:[%s7 + $0x8] sm:$0xf]
    %v1276 = vld [vmem:[%s7 + $0xc] sm:$0xf]
    %v1277 = vld [vmem:[%s7 + $0x10] sm:$0xf]
    %v1278 = vld [vmem:[%s7 + $0x14] sm:$0xf]
    %v1279 = vld [vmem:[%s7 + $0x18] sm:$0xf]
    %v1280 = vld [vmem:[%s7 + $0x1c] sm:$0xf]
    %v1281 = vld [vmem:[%s7 + $0x20] sm:$0xf]
    %v1282 = vld [vmem:[%s7 + $0x24] sm:$0xf]
    %v1283 = vld [vmem:[%s7 + $0x28] sm:$0xf]
    %v1284 = vld [vmem:[%s7 + $0x2c] sm:$0xf]
    %v1285 = vld [vmem:[%s7 + $0x30] sm:$0xf]
    %v1286 = vld [vmem:[%s7 + $0x34] sm:$0xf]
    %v1287 = vld [vmem:[%s7 + $0x38] sm:$0xf]
    %v1288 = vld [vmem:[%s7 + $0x3c] sm:$0xf]
    %v1289 = vld [vmem:[%s7 + $0x40] sm:$0xf]
    %v1290 = vld [vmem:[%s7 + $0x44] sm:$0xf]
    %v1291 = vld [vmem:[%s7 + $0x48] sm:$0xf]
    %v1292 = vld [vmem:[%s7 + $0x4c] sm:$0xf]
    %v1293 = vld [vmem:[%s7 + $0x50] sm:$0xf]
    %v1294 = vld [vmem:[%s7 + $0x54] sm:$0xf]
    %v1295 = vld [vmem:[%s7 + $0x58] sm:$0xf]
    %v1296 = vld [vmem:[%s7 + $0x5c] sm:$0xf]
    %v1297 = vld [vmem:[%s7 + $0x60] sm:$0xf]
    %v1298 = vld [vmem:[%s7 + $0x64] sm:$0xf]
    %v1299 = vld [vmem:[%s7 + $0x68] sm:$0xf]
    %v1300 = vld [vmem:[%s7 + $0x6c] sm:$0xf]
    %v1301 = vld [vmem:[%s7 + $0x70] sm:$0xf]
    %v1302 = vld [vmem:[%s7 + $0x74] sm:$0xf]
    %v1303 = vld [vmem:[%s7 + $0x78] sm:$0xf]
    %v1304 = vld [vmem:[%s7 + $0x7c] sm:$0xf]
    %v1305 = vld [vmem:[%s7 + $0x80] sm:$0xf]
    %v1306 = vld [vmem:[%s7 + $0x84] sm:$0xf]
    %v1307 = vld [vmem:[%s7 + $0x88] sm:$0xf]
    %v1308 = vld [vmem:[%s7 + $0x8c] sm:$0xf]
    %v1309 = vld [vmem:[%s7 + $0x90] sm:$0xf]
    %v1310 = vld [vmem:[%s7 + $0x94] sm:$0xf]
    %v1311 = vld [vmem:[%s7 + $0x98] sm:$0xf]
    %v1312 = vld [vmem:[%s7 + $0x9c] sm:$0xf]
    %v1313 = vld [vmem:[%s7 + $0xa0] sm:$0xf]
    %v1314 = vld [vmem:[%s7 + $0xa4] sm:$0xf]
    %v1315 = vld [vmem:[%s7 + $0xa8] sm:$0xf]
    %v1316 = vld [vmem:[%s7 + $0xac] sm:$0xf]
    %v1317 = vld [vmem:[%s7 + $0xb0] sm:$0xf]
    %v1318 = vld [vmem:[%s7 + $0xb4] sm:$0xf]
    %v1319 = vld [vmem:[%s7 + $0xb8] sm:$0xf]
    %v1320 = vld [vmem:[%s7 + $0xbc] sm:$0xf]
    %v1321 = vld [vmem:[%s7 + $0xc0] sm:$0xf]
    %v1322 = vld [vmem:[%s7 + $0xc4] sm:$0xf]
    %v1323 = vld [vmem:[%s7 + $0xc8] sm:$0xf]
    %v1324 = vld [vmem:[%s7 + $0xcc] sm:$0xf]
    %v1325 = vld [vmem:[%s7 + $0xd0] sm:$0xf]
    %v1326 = vld [vmem:[%s7 + $0xd4] sm:$0xf]
    %v1327 = vld [vmem:[%s7 + $0xd8] sm:$0xf]
    %v1328 = vld [vmem:[%s7 + $0xdc] sm:$0xf]
    %v1329 = vld [vmem:[%s7 + $0xe0] sm:$0xf]
    %v1330 = vld [vmem:[%s7 + $0xe4] sm:$0xf]
    %v1331 = vld [vmem:[%s7 + $0xe8] sm:$0xf]
    %v1332 = vld [vmem:[%s7 + $0xec] sm:$0xf]
    %v1333 = vld [vmem:[%s7 + $0xf0] sm:$0xf]
    %v1334 = vld [vmem:[%s7 + $0xf4] sm:$0xf]
    %v1335 = vld [vmem:[%s7 + $0xf8] sm:$0xf]
    %v1336 = vld [vmem:[%s7 + $0xfc] sm:$0xf]
    %v1337 = vld [vmem:[%s8] sm:$0x1]
    %v1339 = vlaneseq
    %v1340 = vshrl.u32 %v1339, 7
    %v1341 = vsub.s32 0, %v1340
    %v1342 = vrot.slane %v1337, %v1341
    %v1408 = vunpack.c.l.b16 %v1273
    %v1409 = vunpack.c.l.b16 %v1274
    %v1410 = vunpack.c.l.b16 %v1275
    %v1411 = vunpack.c.l.b16 %v1276
    %v1412 = vunpack.c.l.b16 %v1277
    %v1413 = vunpack.c.l.b16 %v1278
    %v1414 = vunpack.c.l.b16 %v1279
    %v1415 = vunpack.c.l.b16 %v1280
    %v1416 = vunpack.c.l.b16 %v1281
    %v1417 = vunpack.c.l.b16 %v1282
    %v1418 = vunpack.c.l.b16 %v1283
    %v1419 = vunpack.c.l.b16 %v1284
    %v1420 = vunpack.c.l.b16 %v1285
    %v1421 = vunpack.c.l.b16 %v1286
    %v1422 = vunpack.c.l.b16 %v1287
    %v1423 = vunpack.c.l.b16 %v1288
    %v1424 = vunpack.c.l.b16 %v1289
    %v1425 = vunpack.c.l.b16 %v1290
    %v1426 = vunpack.c.l.b16 %v1291
    %v1427 = vunpack.c.l.b16 %v1292
    %v1428 = vunpack.c.l.b16 %v1293
    %v1429 = vunpack.c.l.b16 %v1294
    %v1430 = vunpack.c.l.b16 %v1295
    %v1431 = vunpack.c.l.b16 %v1296
    %v1432 = vunpack.c.l.b16 %v1297
    %v1433 = vunpack.c.l.b16 %v1298
    %v1434 = vunpack.c.l.b16 %v1299
    %v1435 = vunpack.c.l.b16 %v1300
    %v1436 = vunpack.c.l.b16 %v1301
    %v1437 = vunpack.c.l.b16 %v1302
    %v1438 = vunpack.c.l.b16 %v1303
    %v1439 = vunpack.c.l.b16 %v1304
    %v1440 = vunpack.c.l.b16 %v1305
    %v1441 = vunpack.c.l.b16 %v1306
    %v1442 = vunpack.c.l.b16 %v1307
    %v1443 = vunpack.c.l.b16 %v1308
    %v1444 = vunpack.c.l.b16 %v1309
    %v1445 = vunpack.c.l.b16 %v1310
    %v1446 = vunpack.c.l.b16 %v1311
    %v1447 = vunpack.c.l.b16 %v1312
    %v1448 = vunpack.c.l.b16 %v1313
    %v1449 = vunpack.c.l.b16 %v1314
    %v1450 = vunpack.c.l.b16 %v1315
    %v1451 = vunpack.c.l.b16 %v1316
    %v1452 = vunpack.c.l.b16 %v1317
    %v1453 = vunpack.c.l.b16 %v1318
    %v1454 = vunpack.c.l.b16 %v1319
    %v1455 = vunpack.c.l.b16 %v1320
    %v1456 = vunpack.c.l.b16 %v1321
    %v1457 = vunpack.c.l.b16 %v1322
    %v1458 = vunpack.c.l.b16 %v1323
    %v1459 = vunpack.c.l.b16 %v1324
    %v1460 = vunpack.c.l.b16 %v1325
    %v1461 = vunpack.c.l.b16 %v1326
    %v1462 = vunpack.c.l.b16 %v1327
    %v1463 = vunpack.c.l.b16 %v1328
    %v1464 = vunpack.c.l.b16 %v1329
    %v1465 = vunpack.c.l.b16 %v1330
    %v1466 = vunpack.c.l.b16 %v1331
    %v1467 = vunpack.c.l.b16 %v1332
    %v1468 = vunpack.c.l.b16 %v1333
    %v1469 = vunpack.c.l.b16 %v1334
    %v1470 = vunpack.c.l.b16 %v1335
    %v1471 = vunpack.c.l.b16 %v1336
    %v1472 = vpack.c.b16 %v1409, %v1408
    %v1473 = vpack.c.b16 %v1411, %v1410
    %v1474 = vpack.c.b16 %v1413, %v1412
    %v1475 = vpack.c.b16 %v1415, %v1414
    %v1476 = vpack.c.b16 %v1417, %v1416
    %v1477 = vpack.c.b16 %v1419, %v1418
    %v1478 = vpack.c.b16 %v1421, %v1420
    %v1479 = vpack.c.b16 %v1423, %v1422
    %v1480 = vpack.c.b16 %v1425, %v1424
    %v1481 = vpack.c.b16 %v1427, %v1426
    %v1482 = vpack.c.b16 %v1429, %v1428
    %v1483 = vpack.c.b16 %v1431, %v1430
    %v1484 = vpack.c.b16 %v1433, %v1432
    %v1485 = vpack.c.b16 %v1435, %v1434
    %v1486 = vpack.c.b16 %v1437, %v1436
    %v1487 = vpack.c.b16 %v1439, %v1438
    %v1488 = vpack.c.b16 %v1441, %v1440
    %v1489 = vpack.c.b16 %v1443, %v1442
    %v1490 = vpack.c.b16 %v1445, %v1444
    %v1491 = vpack.c.b16 %v1447, %v1446
    %v1492 = vpack.c.b16 %v1449, %v1448
    %v1493 = vpack.c.b16 %v1451, %v1450
    %v1494 = vpack.c.b16 %v1453, %v1452
    %v1495 = vpack.c.b16 %v1455, %v1454
    %v1496 = vpack.c.b16 %v1457, %v1456
    %v1497 = vpack.c.b16 %v1459, %v1458
    %v1498 = vpack.c.b16 %v1461, %v1460
    %v1499 = vpack.c.b16 %v1463, %v1462
    %v1500 = vpack.c.b16 %v1465, %v1464
    %v1501 = vpack.c.b16 %v1467, %v1466
    %v1502 = vpack.c.b16 %v1469, %v1468
    %v1503 = vpack.c.b16 %v1471, %v1470
    %1536 = vmatprep.subr.bf16.mxu0 0
    %1537 = vmatpush1.bf16.msra.mxu0 %v1472
    %1538 = vmatprep.subr.bf16.mxu0 0
    %1539 = vmatpush1.bf16.msra.mxu0 %v1473
    %1540 = vmatprep.subr.bf16.mxu0 0
    %1541 = vmatpush1.bf16.msra.mxu0 %v1474
    %1542 = vmatprep.subr.bf16.mxu0 0
    %1543 = vmatpush1.bf16.msra.mxu0 %v1475
    %1544 = vmatprep.subr.bf16.mxu0 0
    %1545 = vmatpush1.bf16.msra.mxu0 %v1476
    %1546 = vmatprep.subr.bf16.mxu0 0
    %1547 = vmatpush1.bf16.msra.mxu0 %v1477
    %1548 = vmatprep.subr.bf16.mxu0 0
    %1549 = vmatpush1.bf16.msra.mxu0 %v1478
    %1550 = vmatprep.subr.bf16.mxu0 0
    %1551 = vmatpush1.bf16.msra.mxu0 %v1479
    %1552 = vmatprep.subr.bf16.mxu0 0
    %1553 = vmatpush1.bf16.msra.mxu0 %v1480
    %1554 = vmatprep.subr.bf16.mxu0 0
    %1555 = vmatpush1.bf16.msra.mxu0 %v1481
    %1556 = vmatprep.subr.bf16.mxu0 0
    %1557 = vmatpush1.bf16.msra.mxu0 %v1482
    %1558 = vmatprep.subr.bf16.mxu0 0
    %1559 = vmatpush1.bf16.msra.mxu0 %v1483
    %1560 = vmatprep.subr.bf16.mxu0 0
    %1561 = vmatpush1.bf16.msra.mxu0 %v1484
    %1562 = vmatprep.subr.bf16.mxu0 0
    %1563 = vmatpush1.bf16.msra.mxu0 %v1485
    %1564 = vmatprep.subr.bf16.mxu0 0
    %1565 = vmatpush1.bf16.msra.mxu0 %v1486
    %1566 = vmatprep.subr.bf16.mxu0 0
    %1567 = vmatpush1.bf16.msra.mxu0 %v1487
    %1568 = vmatprep.mubr.bf16.mxu0 %v1270
    %1569 = vmatmul.mubr.bf16.gmra.mrb[0].mxu0 %v1269
    %v1570 = vpop.f32.mrb[0].mxu0
    %v1571 = vadd.f32 %v1342, %v1570
    %v1572 = vpop.f32.mrb[0].mxu0
    %v1573 = vpop.f32.mrb[0].mxu0
    %v1574 = vpop.f32.mrb[0].mxu0
    %1575 = vdwg.mxu0
    %1576 = vmatprep.subr.bf16.mxu0 0
    %1577 = vmatpush1.bf16.msra.mxu0 %v1488
    %1578 = vmatprep.subr.bf16.mxu0 0
    %1579 = vmatpush1.bf16.msra.mxu0 %v1489
    %1580 = vmatprep.subr.bf16.mxu0 0
    %1581 = vmatpush1.bf16.msra.mxu0 %v1490
    %1582 = vmatprep.subr.bf16.mxu0 0
    %1583 = vmatpush1.bf16.msra.mxu0 %v1491
    %1584 = vmatprep.subr.bf16.mxu0 0
    %1585 = vmatpush1.bf16.msra.mxu0 %v1492
    %1586 = vmatprep.subr.bf16.mxu0 0
    %1587 = vmatpush1.bf16.msra.mxu0 %v1493
    %1588 = vmatprep.subr.bf16.mxu0 0
    %1589 = vmatpush1.bf16.msra.mxu0 %v1494
    %1590 = vmatprep.subr.bf16.mxu0 0
    %1591 = vmatpush1.bf16.msra.mxu0 %v1495
    %1592 = vmatprep.subr.bf16.mxu0 0
    %1593 = vmatpush1.bf16.msra.mxu0 %v1496
    %1594 = vmatprep.subr.bf16.mxu0 0
    %1595 = vmatpush1.bf16.msra.mxu0 %v1497
    %1596 = vmatprep.subr.bf16.mxu0 0
    %1597 = vmatpush1.bf16.msra.mxu0 %v1498
    %1598 = vmatprep.subr.bf16.mxu0 0
    %1599 = vmatpush1.bf16.msra.mxu0 %v1499
    %1600 = vmatprep.subr.bf16.mxu0 0
    %1601 = vmatpush1.bf16.msra.mxu0 %v1500
    %1602 = vmatprep.subr.bf16.mxu0 0
    %1603 = vmatpush1.bf16.msra.mxu0 %v1501
    %1604 = vmatprep.subr.bf16.mxu0 0
    %1605 = vmatpush1.bf16.msra.mxu0 %v1502
    %1606 = vmatprep.subr.bf16.mxu0 0
    %1607 = vmatpush1.bf16.msra.mxu0 %v1503
    %1608 = vmatprep.mubr.bf16.mxu0 %v1272
    %1609 = vmatmul.mubr.bf16.gmra.mrb[0].mxu0 %v1271
    %v1610 = vpop.f32.mrb[0].mxu0
    %v1611 = vadd.f32 %v1571, %v1610
    %v1612 = vpop.f32.mrb[0].mxu0
    %v1613 = vpop.f32.mrb[0].mxu0
    %v1614 = vpop.f32.mrb[0].mxu0
    %1615 = vdwg.mxu0
    %vm1616 = vcmask 15360
    %1617 = vst.msk [vmem:[%s9] sm:$0xff] %vm1616, %v1611
    // Predicated region
    $region42: #{tpu_custom_call.1} parent=1 // pred_check
      _
    $region43: #{tpu_custom_call.1} parent=1 // pred_check_branch
      %1619 = sbr.rel (0) target = $region45
    $region44: #{tpu_custom_call.1} parent=1 // pred_region
      _
    $region45: #{tpu_custom_call.1} parent=1 // pred_fallthru
      _
    // Predicated region
    $region46: #{tpu_custom_call.1} parent=1 // pred_check
      _
    $region47: #{tpu_custom_call.1} parent=1 // pred_check_branch
      %1621 = sbr.rel (0) target = $region49
    $region48: #{tpu_custom_call.1} parent=1 // pred_region
      _
    $region49: #{tpu_custom_call.1} parent=1 // pred_fallthru
      _
    %1622 = vsyncpa [#allocation3], 1

</llo_original>
